<compile_context>
chip_gen: v7x
topology: tpu7x:2x2x1
jax: 0.10.0
libtpu: 0.0.40
codegen_flags: <defaults>
</compile_context>

<pallas_src>
import math

import jax
import jax.numpy as jnp
from jax.experimental import pallas as pl
from jax.experimental.pallas import tpu as pltpu


def _round_up(x, m):
    return (x + m - 1) // m * m


def recommendation_kernel(item_ref, seq_ref, wdiff_ref, bdiff_ref, o_ref):
    """One batch tile.

    item_ref  : (TB, D)     f32  VMEM   query embedding per row
    seq_ref   : (TB, S, D)  f32  VMEM   sequence embeddings
    wdiff_ref : (1, D)      f32  VMEM   weight[1] - weight[0]
    bdiff_ref : (1,)        f32  SMEM   bias[1] - bias[0]
    o_ref     : (TB, 2)     f32  VMEM   log-softmax output
    """
    q = item_ref[...]                                      # (TB, D)
    k = seq_ref[...]                                       # (TB, S, D)

    # --- attention scores over the feature axis (VPU mul + XLU lane-reduce) --
    scores = jnp.sum(q[:, None, :] * k, axis=-1)           # (TB, S)

    # --- softmax over the sequence axis (exact reciprocal: (TB,1) is tiny) ---
    m = jnp.max(scores, axis=-1, keepdims=True)            # (TB, 1)
    e = jnp.exp(scores - m)                                 # (TB, S)
    attn = e / jnp.sum(e, axis=-1, keepdims=True)           # (TB, S)

    # --- context: x = attn @ sequence_emb (sublane reduce over S) ------------
    x = jnp.sum(attn[:, :, None] * k, axis=1)               # (TB, D)

    # --- two-class linear + log_softmax via the logit difference -------------
    #   d = l1 - l0 = x·(w1-w0) + (b1-b0)
    #   log_softmax = (-softplus(d), d - softplus(d))
    d = jnp.sum(x * wdiff_ref[...], axis=-1, keepdims=True) + bdiff_ref[0]  # (TB,1)
    sp = jnp.maximum(d, 0.0) + jnp.log1p(jnp.exp(-jnp.abs(d)))  # stable softplus
    o_ref[:, 0:1] = -sp
    o_ref[:, 1:2] = d - sp


def recommendation_forward(item_emb, sequence_emb, weight, bias, *, tb=2048):
    """Pallas forward for Recommendation.

    item_emb     : (B, 1, D) f32
    sequence_emb : (B, S, D) f32
    weight       : (2, D)    f32
    bias         : (2,)      f32
    returns      : (B, 2)    f32 log-probabilities
    """
    B, Q, D = item_emb.shape
    assert Q == 1, "item embedding is expected to have a length-1 query axis"
    _, S, _ = sequence_emb.shape
    f32 = jnp.float32

    # Batch tile: cap at 2048 (VMEM headroom on v7x) and keep >=2 grid steps
    # whenever B allows so both v7x TensorCores get work.
    TB = max(8, min(_round_up(tb, 8), 2048, _round_up(pl.cdiv(B, 2), 8)))
    grid = (pl.cdiv(B, TB),)

    # No HBM padding passes: reshape (B,1,D)->(B,D) is metadata-only; the
    # kernel blocks use full-extent S / D dims and a partial trailing batch
    # block (garbage rows in that block are masked on write).
    item2d = item_emb.reshape(B, D).astype(f32)
    seq = sequence_emb.astype(f32)
    w_diff = (weight[1] - weight[0]).reshape(1, D).astype(f32)
    b_diff = (bias[1] - bias[0]).reshape(1).astype(f32)

    out = pl.pallas_call(
        recommendation_kernel,
        out_shape=jax.ShapeDtypeStruct((B, 2), f32),
        grid_spec=pltpu.PrefetchScalarGridSpec(
            num_scalar_prefetch=0,
            grid=grid,
            in_specs=[
                pl.BlockSpec((TB, D), lambda b: (b, 0)),             # item tile
                pl.BlockSpec((TB, S, D), lambda b: (b, 0, 0)),       # seq tile
                pl.BlockSpec((1, D), lambda b: (0, 0)),              # weight diff
                pl.BlockSpec(memory_space=pltpu.MemorySpace.SMEM),   # bias diff
            ],
            out_specs=pl.BlockSpec((TB, 2), lambda b: (b, 0)),
        ),
        compiler_params=pltpu.CompilerParams(
            dimension_semantics=("parallel",),
            vmem_limit_bytes=48 * 1024 * 1024,
        ),
    )(item2d, seq, w_diff, b_diff)
    return out


def recommendation_reference(item_emb, sequence_emb, weight, bias):
    # Pure-JAX reference of the same forward (silent correctness check).
    scores = jnp.einsum('bqd,bkd->bqk', item_emb, sequence_emb)
    attn = jax.nn.softmax(scores, axis=-1)
    x = jnp.einsum('bqk,bkd->bqd', attn, sequence_emb)
    logits = jnp.einsum('bqd,cd->bqc', x, weight) + bias
    logits = logits.reshape(logits.shape[0], logits.shape[2])
    return jax.nn.log_softmax(logits, axis=-1)


if __name__ == "__main__":
    # Small, deterministic example shapes consistent with the module.
    B, S, D = 2, 8, 100          # in_features = 100 per the docstring

    key = jax.random.PRNGKey(0)
    k_item, k_seq, k_w, k_b = jax.random.split(key, 4)

    item_emb = jax.random.normal(k_item, (B, 1, D), dtype=jnp.float32)
    sequence_emb = jax.random.normal(k_seq, (B, S, D), dtype=jnp.float32)

    # Parameter init mirrors the PyTorch module: uniform(-stdv, stdv).
    stdv = 1.0 / math.sqrt(D)
    weight = jax.random.uniform(k_w, (2, D), minval=-stdv, maxval=stdv,
                                dtype=jnp.float32)
    bias = jax.random.uniform(k_b, (2,), minval=-stdv, maxval=stdv,
                              dtype=jnp.float32)

    out = jax.block_until_ready(
        recommendation_forward(item_emb, sequence_emb, weight, bias))
    ref = recommendation_reference(item_emb, sequence_emb, weight, bias)
    assert out.shape == (B, 2)
    assert jnp.allclose(out, ref, atol=1e-4, rtol=1e-4)

    # Second check: larger batch, multi-step grid, partial trailing tile.
    B2 = 300
    k2a, k2b = jax.random.split(jax.random.PRNGKey(1))
    item2 = jax.random.normal(k2a, (B2, 1, D), dtype=jnp.float32)
    seq2 = jax.random.normal(k2b, (B2, S, D), dtype=jnp.float32)
    out2 = jax.block_until_ready(
        recommendation_forward(item2, seq2, weight, bias, tb=128))
    ref2 = recommendation_reference(item2, seq2, weight, bias)
    assert out2.shape == (B2, 2)
    assert jnp.allclose(out2, ref2, atol=1e-4, rtol=1e-4)

    print("KERNEL_OK")
</pallas_src>

<mosaic_0001>
module attributes {stable_mosaic.version = 11 : i64} {
  func.func @recommendation_kernel(%arg0: i32, %arg1: memref<8x100xf32, #tpu.memory_space<vmem>>, %arg2: memref<8x8x100xf32, #tpu.memory_space<vmem>>, %arg3: memref<1x100xf32, #tpu.memory_space<vmem>>, %arg4: memref<1xf32, #tpu.memory_space<smem>>, %arg5: memref<8x2xf32, #tpu.memory_space<vmem>>) attributes {dimension_semantics = [#tpu.dimension_semantics<parallel>], iteration_bounds = array<i64: 1>, scalar_prefetch = 0 : i64, scratch_operands = 0 : i64, tpu.core_type = #tpu.core_type<tc>, window_params = [{transform_indices = @transform_0, window_bounds = array<i64: 8, 100>}, {transform_indices = @transform_1, window_bounds = array<i64: 8, 8, 100>}, {pipeline_mode = #tpu.pipeline_mode<synchronous>, transform_indices = @transform_2, window_bounds = array<i64: 1, 100>}, {transform_indices = @transform_3, window_bounds = array<i64: 1>}, {transform_indices = @transform_4, window_bounds = array<i64: 8, 2>}]} {
    %c0 = arith.constant 0 : index
    %c0_0 = arith.constant 0 : index
    %0 = vector.load %arg1[%c0, %c0_0] : memref<8x100xf32, #tpu.memory_space<vmem>>, vector<8x100xf32>
    %c0_1 = arith.constant 0 : index
    %c0_2 = arith.constant 0 : index
    %c0_3 = arith.constant 0 : index
    %1 = vector.load %arg2[%c0_1, %c0_2, %c0_3] : memref<8x8x100xf32, #tpu.memory_space<vmem>>, vector<8x8x100xf32>
    %2 = vector.shape_cast %0 : vector<8x100xf32> to vector<8x1x100xf32>
    %3 = vector.broadcast %2 : vector<8x1x100xf32> to vector<8x8x100xf32>
    %4 = arith.mulf %3, %1 : vector<8x8x100xf32>
    %cst = arith.constant dense<0.000000e+00> : vector<8x8xf32>
    %5 = vector.multi_reduction <add>, %4, %cst [2] : vector<8x8x100xf32> to vector<8x8xf32>
    %cst_4 = arith.constant dense<0xFF800000> : vector<8xf32>
    %6 = vector.multi_reduction <maximumf>, %5, %cst_4 [1] : vector<8x8xf32> to vector<8xf32>
    %7 = vector.shape_cast %6 : vector<8xf32> to vector<8x1xf32>
    %8 = vector.broadcast %7 : vector<8x1xf32> to vector<8x8xf32>
    %9 = arith.subf %5, %8 : vector<8x8xf32>
    %10 = math.exp %9 : vector<8x8xf32>
    %cst_5 = arith.constant dense<0.000000e+00> : vector<8xf32>
    %11 = vector.multi_reduction <add>, %10, %cst_5 [1] : vector<8x8xf32> to vector<8xf32>
    %12 = vector.shape_cast %11 : vector<8xf32> to vector<8x1xf32>
    %13 = vector.broadcast %12 : vector<8x1xf32> to vector<8x8xf32>
    %14 = arith.divf %10, %13 : vector<8x8xf32>
    %15 = vector.shape_cast %14 : vector<8x8xf32> to vector<8x8x1xf32>
    %16 = vector.broadcast %15 : vector<8x8x1xf32> to vector<8x8x100xf32>
    %17 = arith.mulf %16, %1 : vector<8x8x100xf32>
    %cst_6 = arith.constant dense<0.000000e+00> : vector<8x100xf32>
    %18 = vector.multi_reduction <add>, %17, %cst_6 [1] : vector<8x8x100xf32> to vector<8x100xf32>
    %c0_7 = arith.constant 0 : index
    %c0_8 = arith.constant 0 : index
    %19 = vector.load %arg3[%c0_7, %c0_8] : memref<1x100xf32, #tpu.memory_space<vmem>>, vector<1x100xf32>
    %20 = vector.broadcast %19 : vector<1x100xf32> to vector<8x100xf32>
    %21 = arith.mulf %18, %20 : vector<8x100xf32>
    %cst_9 = arith.constant dense<0.000000e+00> : vector<8xf32>
    %22 = vector.multi_reduction <add>, %21, %cst_9 [1] : vector<8x100xf32> to vector<8xf32>
    %23 = vector.shape_cast %22 : vector<8xf32> to vector<8x1xf32>
    %c0_10 = arith.constant 0 : index
    %24 = memref.load %arg4[%c0_10] : memref<1xf32, #tpu.memory_space<smem>>
    %25 = vector.broadcast %24 : f32 to vector<8x1xf32>
    %26 = arith.addf %23, %25 : vector<8x1xf32>
    %cst_11 = arith.constant 0.000000e+00 : f32
    %27 = vector.broadcast %cst_11 : f32 to vector<8x1xf32>
    %28 = arith.maximumf %26, %27 : vector<8x1xf32>
    %29 = math.absf %26 : vector<8x1xf32>
    %cst_12 = arith.constant 0.000000e+00 : f32
    %30 = vector.broadcast %cst_12 : f32 to vector<8x1xf32>
    %31 = arith.subf %30, %29 : vector<8x1xf32>
    %32 = math.exp %31 : vector<8x1xf32>
    %33 = math.log1p %32 : vector<8x1xf32>
    %34 = arith.addf %28, %33 : vector<8x1xf32>
    %cst_13 = arith.constant 0.000000e+00 : f32
    %35 = vector.broadcast %cst_13 : f32 to vector<8x1xf32>
    %36 = arith.subf %35, %34 : vector<8x1xf32>
    %c0_14 = arith.constant 0 : index
    %c0_15 = arith.constant 0 : index
    %37 = vector.load %arg5[%c0_14, %c0_15] : memref<8x2xf32, #tpu.memory_space<vmem>>, vector<8x1xf32>
    tpu.vector_store %arg5[%c0_14, %c0_15], %36 {strides = array<i32>} : memref<8x2xf32, #tpu.memory_space<vmem>>, vector<8x1xf32>,
    %38 = arith.subf %26, %34 : vector<8x1xf32>
    %c0_16 = arith.constant 0 : index
    %c1 = arith.constant 1 : index
    %39 = vector.load %arg5[%c0_16, %c1] : memref<8x2xf32, #tpu.memory_space<vmem>>, vector<8x1xf32>
    tpu.vector_store %arg5[%c0_16, %c1], %38 {strides = array<i32>} : memref<8x2xf32, #tpu.memory_space<vmem>>, vector<8x1xf32>,
    return
  }
  func.func @transform_0(%arg0: i32) -> (i32, i32) {
    %c0_i32 = arith.constant 0 : i32
    %c0_i32_0 = arith.constant 0 : i32
    return %arg0, %c0_i32 : i32, i32
  }
  func.func @transform_1(%arg0: i32) -> (i32, i32, i32) {
    %c0_i32 = arith.constant 0 : i32
    %c0_i32_0 = arith.constant 0 : i32
    %c0_i32_1 = arith.constant 0 : i32
    return %arg0, %c0_i32, %c0_i32_0 : i32, i32, i32
  }
  func.func @transform_2(%arg0: i32) -> (i32, i32) {
    %c0_i32 = arith.constant 0 : i32
    %c0_i32_0 = arith.constant 0 : i32
    %c0_i32_1 = arith.constant 0 : i32
    return %c0_i32, %c0_i32_0 : i32, i32
  }
  func.func @transform_3(%arg0: i32) -> i32 {
    %c0_i32 = arith.constant 0 : i32
    %c0_i32_0 = arith.constant 0 : i32
    return %c0_i32 : i32
  }
  func.func @transform_4(%arg0: i32) -> (i32, i32) {
    %c0_i32 = arith.constant 0 : i32
    %c0_i32_0 = arith.constant 0 : i32
    return %arg0, %c0_i32 : i32, i32
  }
}

</mosaic_0001>

<llo_original>
// kernel: tpu_custom_call.1
$region0: #{tpu_custom_call.1}
  #allocation0 [shape = 'u32[]', space=smem, size = 0x4, offset = 0x4, fixed_abs, tag = 'smem constant byte address 0x4 - core index']
  #allocation1 [shape = 'u32[144,128]{1,0:T(1,128)}', space=vmem, size = 0x12000, scoped, tag = 'internal scratch']
  #allocation2 [shape = 'f32[1]{0:T(128)S(6)}', space=smem, size = 0x200, scoped, tag = 'scoped memory for tpu_custom_call.1']
  %s0 = inlined_call_operand.vmem [shape: f32[2,100], index: 0, kind: input, shape index: {}]
  %s1 = inlined_call_operand.hbm [shape: f32[2,8,100], index: 1, kind: input, shape index: {}]
  %s2 = inlined_call_operand.vmem [shape: f32[1,100], index: 2, kind: input, shape index: {}]
  %s3 = inlined_call_operand.<no memory space> [shape: f32[1], index: 3, kind: input, shape index: {}]
  %s4 = inlined_call_operand.hbm [shape: f32[2,2], index: 4, kind: output, shape index: {}]
  %s5 = sld [smem:[#allocation0]]
  $region30: #{tpu_custom_call.1} parent=0
    _
  %s7 = ssub.s32 1, %s5
  %s8 = scalar_select 0, %s7, %s5
  %9 = sst [smem:[#allocation2]] %s3
  $region1: #{tpu_custom_call.1} parent=0
    #allocation3 [shape = 'u8[32768]{0}', space=vmem, size = 0x8000, scoped, tag = 'input window, operand 1, single buffered']
    #allocation4 [shape = 's32[1]{0}', space=sflag, size = 0x4, scoped, tag = 'scoped memory for tpu_custom_call.1']
    #allocation5 [shape = 's32[1]{0}', space=sflag, size = 0x4, scoped, tag = 'scoped memory for tpu_custom_call.1']
    #allocation6 [shape = 'u8[4096]{0}', space=vmem, size = 0x1000, scoped, tag = 'output window, operand 0, single buffered']
    %10 = vsyncpa [#allocation4], 0
    %11 = vsyncpa [#allocation5], 0
    // Predicated region
    $region2: #{tpu_custom_call.1} parent=1 // pred_check
      _
    $region3: #{tpu_custom_call.1} parent=1 // pred_check_branch
      %13 = sbr.rel (0) target = $region5
    $region4: #{tpu_custom_call.1} parent=1 // pred_region
      _
    $region5: #{tpu_custom_call.1} parent=1 // pred_fallthru
      _
    // Predicated region
    $region6: #{tpu_custom_call.1} parent=1 // pred_check
      _
    $region7: #{tpu_custom_call.1} parent=1 // pred_check_branch
      %15 = sbr.rel (0) target = $region9
    $region8: #{tpu_custom_call.1} parent=1 // pred_region
      %s17 = ssub.s32 1024, 256
      %18 = vsyncadd [#allocation4], %s17
      %s19 = sshll.u32 [#allocation3], 4
      %s20 = int_to_ptr.vmem [resolvable:$true] %s19
      %25 = dma.hbm_to_vmem [thread:$0]  %s1, 256, %s20, [#allocation4], 128, 128, 8
    $region9: #{tpu_custom_call.1} parent=1 // pred_fallthru
      _
    // Predicated region
    $region10: #{tpu_custom_call.1} parent=1 // pred_check
      _
    $region11: #{tpu_custom_call.1} parent=1 // pred_check_branch
      %27 = sbr.rel (0) target = $region13
    $region12: #{tpu_custom_call.1} parent=1 // pred_region
      _
    $region13: #{tpu_custom_call.1} parent=1 // pred_fallthru
      _
    // Predicated region
    $region14: #{tpu_custom_call.1} parent=1 // pred_check
      _
    $region15: #{tpu_custom_call.1} parent=1 // pred_check_branch
      %29 = sbr.rel (0) target = $region17
    $region16: #{tpu_custom_call.1} parent=1 // pred_region
      _
    $region17: #{tpu_custom_call.1} parent=1 // pred_fallthru
      _
    // Predicated region
    $region18: #{tpu_custom_call.1} parent=1 // pred_check
      _
    $region19: #{tpu_custom_call.1} parent=1 // pred_check_branch
      %31 = sbr.rel (0) target = $region21
    $region20: #{tpu_custom_call.1} parent=1 // pred_region
      %32 = dma.done [#allocation4], 1024
    $region21: #{tpu_custom_call.1} parent=1 // pred_fallthru
      _
    %v33 = vld [vmem:[%s0] sm:$0xff]
    %v34 = vld [vmem:[#allocation3] sm:$0xff]
    %v35 = vld [vmem:[#allocation3 + $0x8] sm:$0xff]
    %v36 = vld [vmem:[#allocation3 + $0x10] sm:$0xff]
    %v37 = vld [vmem:[#allocation3 + $0x18] sm:$0xff]
    %v38 = vld [vmem:[#allocation3 + $0x20] sm:$0xff]
    %v39 = vld [vmem:[#allocation3 + $0x28] sm:$0xff]
    %v40 = vld [vmem:[#allocation3 + $0x30] sm:$0xff]
    %v41 = vld [vmem:[#allocation3 + $0x38] sm:$0xff]
    %v43 = vcombine.high %v33, %v33
    %v45 = vunpack.c.l.s4 1966171168
    %v46 = vunpack.c.0.s8 %v45
    %v47 = vlaneseq
    %v48 = vshrl.u32 %v47, 7
    %v49 = vsub.s32 %v46, %v48
    %v50 = vrot.slane %v33, %v49
    %v52 = vunpack.c.l.s4 1966171168
    %v53 = vunpack.c.0.s8 %v52
    %v54 = vlaneseq
    %v55 = vshrl.u32 %v54, 7
    %v56 = vsub.s32 %v53, %v55
    %v57 = vrot.slane %v43, %v56
    %v58 = vcombine.high %v50, %v50
    %v59 = vcombine.high %v57, %v57
    %v61 = vunpack.c.l.s4 1966171168
    %v62 = vunpack.c.0.s8 %v61
    %v63 = vlaneseq
    %v64 = vshrl.u32 %v63, 7
    %v65 = vsub.s32 %v62, %v64
    %v66 = vrot.slane %v50, %v65
    %v68 = vunpack.c.l.s4 1966171168
    %v69 = vunpack.c.0.s8 %v68
    %v70 = vlaneseq
    %v71 = vshrl.u32 %v70, 7
    %v72 = vsub.s32 %v69, %v71
    %v73 = vrot.slane %v57, %v72
    %v75 = vunpack.c.l.s4 1966171168
    %v76 = vunpack.c.0.s8 %v75
    %v77 = vlaneseq
    %v78 = vshrl.u32 %v77, 7
    %v79 = vsub.s32 %v76, %v78
    %v80 = vrot.slane %v58, %v79
    %v82 = vunpack.c.l.s4 1966171168
    %v83 = vunpack.c.0.s8 %v82
    %v84 = vlaneseq
    %v85 = vshrl.u32 %v84, 7
    %v86 = vsub.s32 %v83, %v85
    %v87 = vrot.slane %v59, %v86
    %v88 = vcombine.high %v66, %v66
    %v89 = vcombine.high %v73, %v73
    %v90 = vcombine.high %v80, %v80
    %v91 = vcombine.high %v87, %v87
    %v92 = vlaneseq
    %v93 = vshrl.u32 %v92, 7
    %v94 = vsub.s32 0, %v93
    %v95 = vrot.slane %v66, %v94
    %v96 = vlaneseq
    %v97 = vshrl.u32 %v96, 7
    %v98 = vsub.s32 0, %v97
    %v99 = vrot.slane %v80, %v98
    %v100 = vlaneseq
    %v101 = vshrl.u32 %v100, 7
    %v102 = vsub.s32 0, %v101
    %v103 = vrot.slane %v88, %v102
    %v104 = vlaneseq
    %v105 = vshrl.u32 %v104, 7
    %v106 = vsub.s32 0, %v105
    %v107 = vrot.slane %v90, %v106
    %v108 = vlaneseq
    %v109 = vshrl.u32 %v108, 7
    %v110 = vsub.s32 0, %v109
    %v111 = vrot.slane %v73, %v110
    %v112 = vlaneseq
    %v113 = vshrl.u32 %v112, 7
    %v114 = vsub.s32 0, %v113
    %v115 = vrot.slane %v87, %v114
    %v116 = vlaneseq
    %v117 = vshrl.u32 %v116, 7
    %v118 = vsub.s32 0, %v117
    %v119 = vrot.slane %v89, %v118
    %v120 = vlaneseq
    %v121 = vshrl.u32 %v120, 7
    %v122 = vsub.s32 0, %v121
    %v123 = vrot.slane %v91, %v122
    %v132 = vmul.f32 %v95, %v34
    %v133 = vmul.f32 %v99, %v35
    %v134 = vmul.f32 %v103, %v36
    %v135 = vmul.f32 %v107, %v37
    %v136 = vmul.f32 %v111, %v38
    %v137 = vmul.f32 %v115, %v39
    %v138 = vmul.f32 %v119, %v40
    %v139 = vmul.f32 %v123, %v41
    %vm140 = vcmask 818176
    %v141 = vsel %vm140, %v132, 0.0
    %142 = vadd.xlane.f32.xlu0 %v141
    %v143 = vpop.xlane.xlu0 %142
    %v144 = vsel %vm140, %v133, 0.0
    %145 = vadd.xlane.f32.xlu0 %v144
    %v146 = vpop.xlane.xlu0 %145
    %v147 = vsel %vm140, %v134, 0.0
    %148 = vadd.xlane.f32.xlu0 %v147
    %v149 = vpop.xlane.xlu0 %148
    %v150 = vsel %vm140, %v135, 0.0
    %151 = vadd.xlane.f32.xlu0 %v150
    %v152 = vpop.xlane.xlu0 %151
    %v153 = vsel %vm140, %v136, 0.0
    %154 = vadd.xlane.f32.xlu0 %v153
    %v155 = vpop.xlane.xlu0 %154
    %v156 = vsel %vm140, %v137, 0.0
    %157 = vadd.xlane.f32.xlu0 %v156
    %v158 = vpop.xlane.xlu0 %157
    %v159 = vsel %vm140, %v138, 0.0
    %160 = vadd.xlane.f32.xlu0 %v159
    %v161 = vpop.xlane.xlu0 %160
    %v162 = vsel %vm140, %v139, 0.0
    %163 = vadd.xlane.f32.xlu0 %v162
    %v164 = vpop.xlane.xlu0 %163
    %v173 = vlaneseq
    %v174 = vand.u32 %v173, 127
    %v175 = vlaneseq
    %v176 = vshrl.u32 %v175, 7
    %v177 = vsub.s32 %v174, %v176
    %v178 = vrot.slane %v143, %v177
    %v179 = vlaneseq
    %v180 = vshrl.u32 %v179, 7
    %v181 = vsub.s32 %v174, %v180
    %v182 = vrot.slane %v146, %v181
    %v183 = vlaneseq
    %v184 = vshrl.u32 %v183, 7
    %v185 = vsub.s32 %v174, %v184
    %v186 = vrot.slane %v149, %v185
    %v187 = vlaneseq
    %v188 = vshrl.u32 %v187, 7
    %v189 = vsub.s32 %v174, %v188
    %v190 = vrot.slane %v152, %v189
    %v191 = vlaneseq
    %v192 = vshrl.u32 %v191, 7
    %v193 = vsub.s32 %v174, %v192
    %v194 = vrot.slane %v155, %v193
    %v195 = vlaneseq
    %v196 = vshrl.u32 %v195, 7
    %v197 = vsub.s32 %v174, %v196
    %v198 = vrot.slane %v158, %v197
    %v199 = vlaneseq
    %v200 = vshrl.u32 %v199, 7
    %v201 = vsub.s32 %v174, %v200
    %v202 = vrot.slane %v161, %v201
    %v203 = vlaneseq
    %v204 = vshrl.u32 %v203, 7
    %v205 = vsub.s32 %v174, %v204
    %v206 = vrot.slane %v164, %v205
    %vm207 = vcmask 1041409
    %v208 = vsel %vm207, %v182, %v178
    %vm209 = vcmask 1042434
    %v210 = vsel %vm209, %v186, %v208
    %vm211 = vcmask 1043459
    %v212 = vsel %vm211, %v190, %v210
    %vm213 = vcmask 1044484
    %v214 = vsel %vm213, %v194, %v212
    %vm215 = vcmask 1045509
    %v216 = vsel %vm215, %v198, %v214
    %vm217 = vcmask 1046534
    %v218 = vsel %vm217, %v202, %v216
    %vm219 = vcmask 1047559
    %v220 = vsel %vm219, %v206, %v218
    %vm222 = vcmask 64512
    %v223 = vsel %vm222, %v220, -inf
    %224 = vmax.xlane.f32.xlu0 %v223
    %v225 = vpop.xlane.xlu0 %224
    %v227 = vlaneseq
    %v228 = vshrl.u32 %v227, 7
    %v229 = vsub.s32 0, %v228
    %v230 = vrot.slane %v225, %v229
    %v231 = vlaneseq
    %v232 = vshrl.u32 %v231, 7
    %v233 = vsub.s32 1, %v232
    %v234 = vrot.slane %v225, %v233
    %v235 = vlaneseq
    %v236 = vshrl.u32 %v235, 7
    %v237 = vsub.s32 2, %v236
    %v238 = vrot.slane %v225, %v237
    %v239 = vlaneseq
    %v240 = vshrl.u32 %v239, 7
    %v241 = vsub.s32 3, %v240
    %v242 = vrot.slane %v225, %v241
    %v243 = vlaneseq
    %v244 = vshrl.u32 %v243, 7
    %v245 = vsub.s32 4, %v244
    %v246 = vrot.slane %v225, %v245
    %v247 = vlaneseq
    %v248 = vshrl.u32 %v247, 7
    %v249 = vsub.s32 5, %v248
    %v250 = vrot.slane %v225, %v249
    %v251 = vlaneseq
    %v252 = vshrl.u32 %v251, 7
    %v253 = vsub.s32 6, %v252
    %v254 = vrot.slane %v225, %v253
    %v255 = vlaneseq
    %v256 = vshrl.u32 %v255, 7
    %v257 = vsub.s32 7, %v256
    %v258 = vrot.slane %v225, %v257
    %v267 = vsub.f32 %v143, %v230
    %v268 = vsub.f32 %v146, %v234
    %v269 = vsub.f32 %v149, %v238
    %v270 = vsub.f32 %v152, %v242
    %v271 = vsub.f32 %v155, %v246
    %v272 = vsub.f32 %v158, %v250
    %v273 = vsub.f32 %v161, %v254
    %v274 = vsub.f32 %v164, %v258
    %v275 = vmul.f32 %v267, 1.442695
    %v276 = vpow.pop %v275
    %v277 = vmul.f32 %v268, 1.442695
    %v278 = vpow.pop %v277
    %v279 = vmul.f32 %v269, 1.442695
    %v280 = vpow.pop %v279
    %v281 = vmul.f32 %v270, 1.442695
    %v282 = vpow.pop %v281
    %v283 = vmul.f32 %v271, 1.442695
    %v284 = vpow.pop %v283
    %v285 = vmul.f32 %v272, 1.442695
    %v286 = vpow.pop %v285
    %v287 = vmul.f32 %v273, 1.442695
    %v288 = vpow.pop %v287
    %v289 = vmul.f32 %v274, 1.442695
    %v290 = vpow.pop %v289
    %299 = vset.pattern.permute.xlu0 0
    %300 = vperm.xlu0 %299, %v276
    %v301 = vpop.permute.xlu0 %300
    %302 = vset.pattern.permute.xlu0 0
    %303 = vperm.xlu0 %302, %v278
    %v304 = vpop.permute.xlu0 %303
    %305 = vset.pattern.permute.xlu0 0
    %306 = vperm.xlu0 %305, %v280
    %v307 = vpop.permute.xlu0 %306
    %308 = vset.pattern.permute.xlu0 0
    %309 = vperm.xlu0 %308, %v282
    %v310 = vpop.permute.xlu0 %309
    %311 = vset.pattern.permute.xlu0 0
    %312 = vperm.xlu0 %311, %v284
    %v313 = vpop.permute.xlu0 %312
    %314 = vset.pattern.permute.xlu0 0
    %315 = vperm.xlu0 %314, %v286
    %v316 = vpop.permute.xlu0 %315
    %317 = vset.pattern.permute.xlu0 0
    %318 = vperm.xlu0 %317, %v288
    %v319 = vpop.permute.xlu0 %318
    %320 = vset.pattern.permute.xlu0 0
    %321 = vperm.xlu0 %320, %v290
    %v322 = vpop.permute.xlu0 %321
    %v323 = vlaneseq
    %v324 = vshrl.u32 %v323, 7
    %v325 = vsub.s32 %v174, %v324
    %v326 = vrot.slane %v301, %v325
    %v327 = vlaneseq
    %v328 = vshrl.u32 %v327, 7
    %v329 = vsub.s32 %v174, %v328
    %v330 = vrot.slane %v304, %v329
    %v331 = vlaneseq
    %v332 = vshrl.u32 %v331, 7
    %v333 = vsub.s32 %v174, %v332
    %v334 = vrot.slane %v307, %v333
    %v335 = vlaneseq
    %v336 = vshrl.u32 %v335, 7
    %v337 = vsub.s32 %v174, %v336
    %v338 = vrot.slane %v310, %v337
    %v339 = vlaneseq
    %v340 = vshrl.u32 %v339, 7
    %v341 = vsub.s32 %v174, %v340
    %v342 = vrot.slane %v313, %v341
    %v343 = vlaneseq
    %v344 = vshrl.u32 %v343, 7
    %v345 = vsub.s32 %v174, %v344
    %v346 = vrot.slane %v316, %v345
    %v347 = vlaneseq
    %v348 = vshrl.u32 %v347, 7
    %v349 = vsub.s32 %v174, %v348
    %v350 = vrot.slane %v319, %v349
    %v351 = vlaneseq
    %v352 = vshrl.u32 %v351, 7
    %v353 = vsub.s32 %v174, %v352
    %v354 = vrot.slane %v322, %v353
    %v355 = vsel %vm207, %v330, %v326
    %v356 = vsel %vm209, %v334, %v355
    %v357 = vsel %vm211, %v338, %v356
    %v358 = vsel %vm213, %v342, %v357
    %v359 = vsel %vm215, %v346, %v358
    %v360 = vsel %vm217, %v350, %v359
    %v361 = vsel %vm219, %v354, %v360
    %v363 = vsel %vm222, %v361, 0.0
    %364 = vadd.xlane.f32.xlu0 %v363
    %v365 = vpop.xlane.xlu0 %364
    %v367 = vlaneseq
    %v368 = vshrl.u32 %v367, 7
    %v369 = vsub.s32 0, %v368
    %v370 = vrot.slane %v365, %v369
    %v371 = vlaneseq
    %v372 = vshrl.u32 %v371, 7
    %v373 = vsub.s32 1, %v372
    %v374 = vrot.slane %v365, %v373
    %v375 = vlaneseq
    %v376 = vshrl.u32 %v375, 7
    %v377 = vsub.s32 2, %v376
    %v378 = vrot.slane %v365, %v377
    %v379 = vlaneseq
    %v380 = vshrl.u32 %v379, 7
    %v381 = vsub.s32 3, %v380
    %v382 = vrot.slane %v365, %v381
    %v383 = vlaneseq
    %v384 = vshrl.u32 %v383, 7
    %v385 = vsub.s32 4, %v384
    %v386 = vrot.slane %v365, %v385
    %v387 = vlaneseq
    %v388 = vshrl.u32 %v387, 7
    %v389 = vsub.s32 5, %v388
    %v390 = vrot.slane %v365, %v389
    %v391 = vlaneseq
    %v392 = vshrl.u32 %v391, 7
    %v393 = vsub.s32 6, %v392
    %v394 = vrot.slane %v365, %v393
    %v395 = vlaneseq
    %v396 = vshrl.u32 %v395, 7
    %v397 = vsub.s32 7, %v396
    %v398 = vrot.slane %v365, %v397
    %v407 = vrcp.pop %v370
    %v408 = vmul.f32 %v276, %v407
    %v409 = vrcp.pop %v374
    %v410 = vmul.f32 %v278, %v409
    %v411 = vrcp.pop %v378
    %v412 = vmul.f32 %v280, %v411
    %v413 = vrcp.pop %v382
    %v414 = vmul.f32 %v282, %v413
    %v415 = vrcp.pop %v386
    %v416 = vmul.f32 %v284, %v415
    %v417 = vrcp.pop %v390
    %v418 = vmul.f32 %v286, %v417
    %v419 = vrcp.pop %v394
    %v420 = vmul.f32 %v288, %v419
    %v421 = vrcp.pop %v398
    %v422 = vmul.f32 %v290, %v421
    %424 = vset.pattern.permute.xlu0 0
    %425 = vperm.xlu0 %424, %v408
    %v426 = vpop.permute.xlu0 %425
    %429 = vset.pattern.permute.xlu0 0
    %430 = vperm.xlu0 %429, %v410
    %v431 = vpop.permute.xlu0 %430
    %434 = vset.pattern.permute.xlu0 0
    %435 = vperm.xlu0 %434, %v412
    %v436 = vpop.permute.xlu0 %435
    %439 = vset.pattern.permute.xlu0 0
    %440 = vperm.xlu0 %439, %v414
    %v441 = vpop.permute.xlu0 %440
    %444 = vset.pattern.permute.xlu0 0
    %445 = vperm.xlu0 %444, %v416
    %v446 = vpop.permute.xlu0 %445
    %449 = vset.pattern.permute.xlu0 0
    %450 = vperm.xlu0 %449, %v418
    %v451 = vpop.permute.xlu0 %450
    %454 = vset.pattern.permute.xlu0 0
    %455 = vperm.xlu0 %454, %v420
    %v456 = vpop.permute.xlu0 %455
    %459 = vset.pattern.permute.xlu0 0
    %460 = vperm.xlu0 %459, %v422
    %v461 = vpop.permute.xlu0 %460
    %v463 = vmul.f32 %v426, %v34
    %v464 = vmul.f32 %v431, %v35
    %v465 = vmul.f32 %v436, %v36
    %v466 = vmul.f32 %v441, %v37
    %v467 = vmul.f32 %v446, %v38
    %v468 = vmul.f32 %v451, %v39
    %v469 = vmul.f32 %v456, %v40
    %v470 = vmul.f32 %v461, %v41
    %v471 = vsel %vm140, %v463, 0.0
    %v472 = vrot.slane %v471, 4
    %v473 = vadd.f32 %v471, %v472
    %v474 = vrot.slane %v473, 2
    %v475 = vadd.f32 %v473, %v474
    %v476 = vrot.slane %v475, 1
    %v477 = vadd.f32 %v475, %v476
    %v478 = vsel %vm140, %v464, 0.0
    %v479 = vrot.slane %v478, 4
    %v480 = vadd.f32 %v478, %v479
    %v481 = vrot.slane %v480, 2
    %v482 = vadd.f32 %v480, %v481
    %v483 = vrot.slane %v482, 1
    %v484 = vadd.f32 %v482, %v483
    %v485 = vsel %vm140, %v465, 0.0
    %v486 = vrot.slane %v485, 4
    %v487 = vadd.f32 %v485, %v486
    %v488 = vrot.slane %v487, 2
    %v489 = vadd.f32 %v487, %v488
    %v490 = vrot.slane %v489, 1
    %v491 = vadd.f32 %v489, %v490
    %v492 = vsel %vm140, %v466, 0.0
    %v493 = vrot.slane %v492, 4
    %v494 = vadd.f32 %v492, %v493
    %v495 = vrot.slane %v494, 2
    %v496 = vadd.f32 %v494, %v495
    %v497 = vrot.slane %v496, 1
    %v498 = vadd.f32 %v496, %v497
    %v499 = vsel %vm140, %v467, 0.0
    %v500 = vrot.slane %v499, 4
    %v501 = vadd.f32 %v499, %v500
    %v502 = vrot.slane %v501, 2
    %v503 = vadd.f32 %v501, %v502
    %v504 = vrot.slane %v503, 1
    %v505 = vadd.f32 %v503, %v504
    %v506 = vsel %vm140, %v468, 0.0
    %v507 = vrot.slane %v506, 4
    %v508 = vadd.f32 %v506, %v507
    %v509 = vrot.slane %v508, 2
    %v510 = vadd.f32 %v508, %v509
    %v511 = vrot.slane %v510, 1
    %v512 = vadd.f32 %v510, %v511
    %v513 = vsel %vm140, %v469, 0.0
    %v514 = vrot.slane %v513, 4
    %v515 = vadd.f32 %v513, %v514
    %v516 = vrot.slane %v515, 2
    %v517 = vadd.f32 %v515, %v516
    %v518 = vrot.slane %v517, 1
    %v519 = vadd.f32 %v517, %v518
    %v520 = vsel %vm140, %v470, 0.0
    %v521 = vrot.slane %v520, 4
    %v522 = vadd.f32 %v520, %v521
    %v523 = vrot.slane %v522, 2
    %v524 = vadd.f32 %v522, %v523
    %v525 = vrot.slane %v524, 1
    %v526 = vadd.f32 %v524, %v525
    %v527 = vld [vmem:[%s2] sm:$0x1]
    %v529 = vlaneseq
    %v530 = vshrl.u32 %v529, 7
    %v531 = vsub.s32 0, %v530
    %v532 = vrot.slane %v527, %v531
    %v534 = vmul.f32 %v477, %v532
    %v535 = vmul.f32 %v484, %v532
    %v536 = vmul.f32 %v491, %v532
    %v537 = vmul.f32 %v498, %v532
    %v538 = vmul.f32 %v505, %v532
    %v539 = vmul.f32 %v512, %v532
    %v540 = vmul.f32 %v519, %v532
    %v541 = vmul.f32 %v526, %v532
    %v550 = vrot.slane %v535, 7
    %v551 = vsel %vm207, %v550, %v534
    %v552 = vrot.slane %v536, 6
    %v553 = vsel %vm209, %v552, %v551
    %v554 = vrot.slane %v537, 5
    %v555 = vsel %vm211, %v554, %v553
    %v556 = vrot.slane %v538, 4
    %v557 = vsel %vm213, %v556, %v555
    %v558 = vrot.slane %v539, 3
    %v559 = vsel %vm215, %v558, %v557
    %v560 = vrot.slane %v540, 2
    %v561 = vsel %vm217, %v560, %v559
    %v562 = vrot.slane %v541, 1
    %v563 = vsel %vm219, %v562, %v561
    %v565 = vsel %vm140, %v563, 0.0
    %566 = vadd.xlane.f32.xlu0 %v565
    %v567 = vpop.xlane.xlu0 %566
    %s568 = sld [smem:[#allocation2]]
    %v569 = vstv %s568
    %v570 = vadd.f32 %v567, %v569
    %v571 = vmax.f32 %v570, 0.0
    %v572 = vand.u32 2147483647, %v570
    %v573 = vsub.f32 0.0, %v572
    %v574 = vmul.f32 %v573, 1.442695
    %v575 = vpow.pop %v574
    %v576 = vadd.f32 %v575, 1.0
    %v577 = vlog2.pop %v576
    %v578 = vmul.f32 %v577, 0.6931472
    %v579 = vmul.f32 -0.5, %v575
    %v580 = vadd.f32 %v579, 1.0
    %v581 = vmul.f32 %v580, %v575
    %v582 = vand.u32 2147483647, %v575
    %vm583 = vcmp.lt.f32.partialorder %v582, 0.0004427343
    %v584 = vsel %vm583, %v581, %v578
    %v585 = vadd.f32 %v571, %v584
    %v586 = vsub.f32 0.0, %v585
    %vm587 = vcmask 7168
    %588 = vst.msk [vmem:[#allocation6] sm:$0xff] %vm587, %v586
    %v589 = vsub.f32 %v570, %v585
    %vm590 = vcmask 15368
    %591 = vst.msk [vmem:[#allocation6] sm:$0xff] %vm590, %v589
    // Predicated region
    $region22: #{tpu_custom_call.1} parent=1 // pred_check
      _
    $region23: #{tpu_custom_call.1} parent=1 // pred_check_branch
      %593 = sbr.rel (0) target = $region25
    $region24: #{tpu_custom_call.1} parent=1 // pred_region
      %s595 = ssub.s32 128, 32
      %596 = vsyncadd [#allocation5], %s595
      %s597 = sshll.u32 [#allocation6], 4
      %s598 = int_to_ptr.vmem [resolvable:$true] %s597
      %603 = dma.vmem_to_hbm [thread:$0]  %s598, 32, %s4, [#allocation5], 32, 32, 2
    $region25: #{tpu_custom_call.1} parent=1 // pred_fallthru
      _
    // Predicated region
    $region26: #{tpu_custom_call.1} parent=1 // pred_check
      _
    $region27: #{tpu_custom_call.1} parent=1 // pred_check_branch
      %605 = sbr.rel (0) target = $region29
    $region28: #{tpu_custom_call.1} parent=1 // pred_region
      %606 = dma.done [#allocation5], 128
    $region29: #{tpu_custom_call.1} parent=1 // pred_fallthru
      _
    %607 = vsyncpa [#allocation4], 1
    %608 = vsyncpa [#allocation5], 1

</llo_original>
